<compile_context>
chip_gen: v6e
topology: v6e:2x2x1
jax: 0.10.0
libtpu: 0.0.40
codegen_flags: <defaults>
</compile_context>

<pallas_src>
import jax
import jax.numpy as jnp
from jax import lax
from jax.experimental import pallas as pl
from jax.experimental.pallas import tpu as pltpu

LANE = 128     # TPU lane width
CHUNK = 512    # lane sub-chunk walked by the in-kernel inner loop


def _round_up(n, m):
    return ((n + m - 1) // m) * m


def gennet_kernel(x_ref, w1_ref, b1_ref, w2_ref, b2_ref, w3_ref, b3_ref, o_ref):
    """Feature-major / batch-in-lanes GenNet forward for one batch tile.

    x_ref : (dim_in, tb)    f32      w1_ref: (H, dim_in)     f32 (PyTorch (out,in))
    o_ref : (dim_out, tb)   f32      w2_ref: (H, H)          bf16/f32
                                     w3_ref: (d_out_pad8, H) bf16/f32
                                     b*_ref: column biases, f32
    """
    dim_in, tb = x_ref.shape
    H = w2_ref.shape[0]
    d_out = o_ref.shape[0]        # real dim_out (unpadded lane-dense store)
    d_out_mx = w3_ref.shape[0]    # fc3 rows padded to a sublane tile (8)

    chunk = min(CHUNK, tb)
    n_chunks = tb // chunk        # tb is a multiple of chunk by construction

    # Loop-invariant loads and lane-broadcasts hoisted out of the chunk loop
    # (JAX does not CSE broadcast_in_dim inside the loop body).
    w2 = w2_ref[...]
    w3 = w3_ref[...]
    b1_b = jnp.broadcast_to(b1_ref[...], (H, chunk))
    b2_b = jnp.broadcast_to(b2_ref[...], (H, chunk))
    b3_b = jnp.broadcast_to(b3_ref[...], (d_out_mx, chunk))
    if dim_in <= 8:
        w1_full = w1_ref[...]                                   # (H, dim_in)
        w1_cols = [jnp.broadcast_to(w1_full[:, k:k + 1], (H, chunk))
                   for k in range(dim_in)]
        w1 = None
    else:
        w1_cols = None
        w1 = w1_ref[...]

    def compute_chunk(start):
        sl = pl.ds(start, chunk)
        x_c = x_ref[:, sl]                                      # (dim_in, chunk)

        # ---- fc1 + ReLU: K is tiny -> unrolled VPU FMAs, MXU stays free ----
        if dim_in <= 8:
            h1 = b1_b
            for k in range(dim_in):                             # static unroll
                h1 = h1 + w1_cols[k] * x_c[k:k + 1, :]
        else:
            h1 = jnp.dot(w1, x_c, preferred_element_type=jnp.float32) + b1_b
        h1 = jnp.maximum(h1, 0.0)                               # (H, chunk) f32

        # ---- fc2 + ReLU: MXU (bf16 operands, f32 acc), f32 VPU epilogue ----
        h2 = jnp.dot(w2, h1.astype(w2.dtype),
                     preferred_element_type=jnp.float32) + b2_b
        h2 = jnp.maximum(h2, 0.0)                               # (H, chunk) f32

        # ---- fc3: MXU; rows padded to 8 for the MXU only, store unpadded ----
        out = jnp.dot(w3, h2.astype(w3.dtype),
                      preferred_element_type=jnp.float32) + b3_b
        o_ref[:, sl] = out[:d_out, :].astype(o_ref.dtype)       # lane-dense

    if n_chunks == 1:
        compute_chunk(0)
    else:
        def body(c, carry):
            compute_chunk(pl.multiple_of(c * chunk, LANE))
            return carry
        lax.fori_loop(0, n_chunks, body, 0, unroll=n_chunks <= 8)


def prepare_params(params, mxu_dtype=jnp.bfloat16):
    """One-time constant prep (hoisted out of the forward path).

    params: PyTorch-layout weights w1 (H, dim_in), w2 (H, H), w3 (dim_out, H),
            biases b1/b2/b3 of shape (out,).
    """
    w1 = params["w1"].astype(jnp.float32)                # VPU path stays f32
    w2 = params["w2"].astype(mxu_dtype)                  # MXU operand
    w3 = params["w3"].astype(jnp.float32)
    H = w2.shape[0]
    dim_out = w3.shape[0]
    d_out_mx = _round_up(dim_out, 8)                     # sublane-tile rows for MXU
    w3p = jnp.zeros((d_out_mx, H), jnp.float32).at[:dim_out].set(w3).astype(mxu_dtype)
    b3p = jnp.zeros((d_out_mx, 1), jnp.float32).at[:dim_out, 0].set(
        params["b3"].astype(jnp.float32))
    return dict(
        w1=w1,
        b1=params["b1"].astype(jnp.float32).reshape(-1, 1),
        w2=w2,
        b2=params["b2"].astype(jnp.float32).reshape(-1, 1),
        w3=w3p,
        b3=b3p,
        dim_out=int(dim_out),
    )


def _pick_tile(B, tb_max):
    """Batch tile (lanes) + padded batch.  Tile always divides padded batch and
    is either <= CHUNK (single sub-chunk) or a multiple of CHUNK."""
    if B <= CHUNK:
        tb = _round_up(B, LANE)
        return tb, tb                            # single step, single chunk
    if B <= tb_max:
        tb = _round_up(B, CHUNK)
        return tb, tb                            # single step
    if B <= 2 * tb_max:
        tb = _round_up((B + 1) // 2, CHUNK)      # exactly two steps (v7x: 2 TCs)
        return tb, 2 * tb
    tb = tb_max
    return tb, _round_up(B, tb)                  # >= 3 steps


def gennet_forward(x, prepped, *, tb=2048):
    """x: (B, dim_in) f32 -> (B, dim_out) f32.  `prepped` from prepare_params()."""
    B, dim_in = x.shape
    w1, b1 = prepped["w1"], prepped["b1"]
    w2, b2 = prepped["w2"], prepped["b2"]
    w3, b3 = prepped["w3"], prepped["b3"]
    H = w2.shape[0]
    dim_out = prepped["dim_out"]
    d_out_mx = w3.shape[0]

    tb_max = max(CHUNK, _round_up(tb, CHUNK))
    tb_eff, B_pad = _pick_tile(B, tb_max)
    assert tb_eff <= CHUNK or tb_eff % CHUNK == 0
    grid = (B_pad // tb_eff,)

    # Batch-in-lanes input; zero-pad ragged batch along the lane dim.
    x_t = x.T.astype(jnp.float32)                         # (dim_in, B)
    if B_pad != B:
        x_t = jnp.zeros((dim_in, B_pad), jnp.float32).at[:, :B].set(x_t)

    resident = lambda shape: pl.BlockSpec(shape, lambda i: (0, 0))

    flops = 2 * B_pad * (dim_in * H + H * H + H * d_out_mx)
    bytes_accessed = (4 * B_pad * (dim_in + dim_out)
                      + 4 * (H * dim_in + 2 * H + d_out_mx)
                      + w2.dtype.itemsize * H * H
                      + w3.dtype.itemsize * d_out_mx * H)

    out_t = pl.pallas_call(
        gennet_kernel,
        out_shape=jax.ShapeDtypeStruct((dim_out, B_pad), jnp.float32),
        grid_spec=pltpu.PrefetchScalarGridSpec(
            num_scalar_prefetch=0,
            grid=grid,
            in_specs=[
                pl.BlockSpec((dim_in, tb_eff), lambda i: (0, i)),   # x tile
                resident((H, dim_in)),   resident((H, 1)),          # fc1
                resident((H, H)),        resident((H, 1)),          # fc2
                resident((d_out_mx, H)), resident((d_out_mx, 1)),   # fc3
            ],
            out_specs=pl.BlockSpec((dim_out, tb_eff), lambda i: (0, i)),
        ),
        compiler_params=pltpu.CompilerParams(
            dimension_semantics=("parallel",)),
        cost_estimate=pl.CostEstimate(
            flops=flops, transcendentals=0, bytes_accessed=bytes_accessed),
    )(x_t, w1, b1, w2, b2, w3, b3)

    return out_t[:, :B].T


def init_params(key, dim_in, dim_out, hidden=128):
    """Deterministic synthetic init, PyTorch nn.Linear layout and fan-in bound."""
    ks = jax.random.split(key, 6)

    def lin(kw, kb, fan_in, fan_out):
        bound = 1.0 / (fan_in ** 0.5)
        w = jax.random.uniform(kw, (fan_out, fan_in), jnp.float32, -bound, bound)
        b = jax.random.uniform(kb, (fan_out,), jnp.float32, -bound, bound)
        return w, b

    w1, b1 = lin(ks[0], ks[1], dim_in, hidden)
    w2, b2 = lin(ks[2], ks[3], hidden, hidden)
    w3, b3 = lin(ks[4], ks[5], hidden, dim_out)
    return dict(w1=w1, b1=b1, w2=w2, b2=b2, w3=w3, b3=b3)


def gennet_reference(x, p):
    h1 = jnp.maximum(x @ p["w1"].T + p["b1"], 0.0)
    h2 = jnp.maximum(h1 @ p["w2"].T + p["b2"], 0.0)
    return h2 @ p["w3"].T + p["b3"]


if __name__ == "__main__":
    key = jax.random.PRNGKey(0)
    k_p, kx1, kx2, kx3, kx4 = jax.random.split(key, 5)

    dim_in, dim_out, hidden = 2, 2, 128              # 2D-mixture generator
    params = init_params(k_p, dim_in, dim_out, hidden)
    prepped_f32 = prepare_params(params, mxu_dtype=jnp.float32)
    prepped_bf16 = prepare_params(params, mxu_dtype=jnp.bfloat16)

    # Batch sizes exercising: tiny (single 128-lane chunk), ragged single-step,
    # two-step grid (both v7x cores), and a multi-step grid with the full
    # 2048-lane tile + inner 512-lane chunk loop.
    for k_x, B in zip((kx1, kx2, kx3, kx4), (8, 300, 2500, 5000)):
        x = jax.random.normal(k_x, (B, dim_in), jnp.float32)
        ref = gennet_reference(x, params)

        # Exact-path check (f32 MXU operands).
        out_f32 = jax.block_until_ready(gennet_forward(x, prepped_f32))
        assert out_f32.shape == (B, dim_out)
        assert jnp.allclose(out_f32, ref, atol=1e-4, rtol=1e-4), \
            f"f32 path mismatch at B={B}"

        # Default fast path (bf16 MXU operands, f32 accumulation).
        out_bf16 = jax.block_until_ready(gennet_forward(x, prepped_bf16))
        assert out_bf16.shape == (B, dim_out)
        assert jnp.allclose(out_bf16, ref, atol=5e-2, rtol=5e-2), \
            f"bf16 path mismatch at B={B}"

    print("KERNEL_OK")
</pallas_src>

<mosaic_0001>
module attributes {stable_mosaic.version = 11 : i64} {
  func.func @gennet_kernel(%arg0: i32, %arg1: memref<2x128xf32, #tpu.memory_space<vmem>>, %arg2: memref<128x2xf32, #tpu.memory_space<vmem>>, %arg3: memref<128x1xf32, #tpu.memory_space<vmem>>, %arg4: memref<128x128xf32, #tpu.memory_space<vmem>>, %arg5: memref<128x1xf32, #tpu.memory_space<vmem>>, %arg6: memref<8x128xf32, #tpu.memory_space<vmem>>, %arg7: memref<8x1xf32, #tpu.memory_space<vmem>>, %arg8: memref<2x128xf32, #tpu.memory_space<vmem>>) attributes {dimension_semantics = [#tpu.dimension_semantics<parallel>], iteration_bounds = array<i64: 1>, scalar_prefetch = 0 : i64, scratch_operands = 0 : i64, tpu.core_type = #tpu.core_type<tc>, window_params = [{transform_indices = @transform_0, window_bounds = array<i64: 2, 128>}, {pipeline_mode = #tpu.pipeline_mode<synchronous>, transform_indices = @transform_1, window_bounds = array<i64: 128, 2>}, {pipeline_mode = #tpu.pipeline_mode<synchronous>, transform_indices = @transform_2, window_bounds = array<i64: 128, 1>}, {pipeline_mode = #tpu.pipeline_mode<synchronous>, transform_indices = @transform_3, window_bounds = array<i64: 128, 128>}, {pipeline_mode = #tpu.pipeline_mode<synchronous>, transform_indices = @transform_4, window_bounds = array<i64: 128, 1>}, {pipeline_mode = #tpu.pipeline_mode<synchronous>, transform_indices = @transform_5, window_bounds = array<i64: 8, 128>}, {pipeline_mode = #tpu.pipeline_mode<synchronous>, transform_indices = @transform_6, window_bounds = array<i64: 8, 1>}, {transform_indices = @transform_7, window_bounds = array<i64: 2, 128>}]} {
    %c0 = arith.constant 0 : index
    %c0_0 = arith.constant 0 : index
    %0 = vector.load %arg4[%c0, %c0_0] : memref<128x128xf32, #tpu.memory_space<vmem>>, vector<128x128xf32>
    %c0_1 = arith.constant 0 : index
    %c0_2 = arith.constant 0 : index
    %1 = vector.load %arg6[%c0_1, %c0_2] : memref<8x128xf32, #tpu.memory_space<vmem>>, vector<8x128xf32>
    %c0_3 = arith.constant 0 : index
    %c0_4 = arith.constant 0 : index
    %2 = vector.load %arg3[%c0_3, %c0_4] : memref<128x1xf32, #tpu.memory_space<vmem>>, vector<128x1xf32>
    %3 = vector.shape_cast %2 : vector<128x1xf32> to vector<128x1xf32>
    %4 = vector.broadcast %3 : vector<128x1xf32> to vector<128x128xf32>
    %c0_5 = arith.constant 0 : index
    %c0_6 = arith.constant 0 : index
    %5 = vector.load %arg5[%c0_5, %c0_6] : memref<128x1xf32, #tpu.memory_space<vmem>>, vector<128x1xf32>
    %6 = vector.shape_cast %5 : vector<128x1xf32> to vector<128x1xf32>
    %7 = vector.broadcast %6 : vector<128x1xf32> to vector<128x128xf32>
    %c0_7 = arith.constant 0 : index
    %c0_8 = arith.constant 0 : index
    %8 = vector.load %arg7[%c0_7, %c0_8] : memref<8x1xf32, #tpu.memory_space<vmem>>, vector<8x1xf32>
    %9 = vector.shape_cast %8 : vector<8x1xf32> to vector<8x1xf32>
    %10 = vector.broadcast %9 : vector<8x1xf32> to vector<8x128xf32>
    %c0_9 = arith.constant 0 : index
    %c0_10 = arith.constant 0 : index
    %11 = vector.load %arg2[%c0_9, %c0_10] : memref<128x2xf32, #tpu.memory_space<vmem>>, vector<128x2xf32>
    %12 = vector.extract_strided_slice %11 {offsets = [0, 0], sizes = [128, 1], strides = [1, 1]} : vector<128x2xf32> to vector<128x1xf32>
    %13 = vector.shape_cast %12 : vector<128x1xf32> to vector<128x1xf32>
    %14 = vector.broadcast %13 : vector<128x1xf32> to vector<128x128xf32>
    %15 = vector.extract_strided_slice %11 {offsets = [0, 1], sizes = [128, 1], strides = [1, 1]} : vector<128x2xf32> to vector<128x1xf32>
    %16 = vector.shape_cast %15 : vector<128x1xf32> to vector<128x1xf32>
    %17 = vector.broadcast %16 : vector<128x1xf32> to vector<128x128xf32>
    %c0_11 = arith.constant 0 : index
    %c0_12 = arith.constant 0 : index
    %18 = vector.load %arg1[%c0_11, %c0_12] : memref<2x128xf32, #tpu.memory_space<vmem>>, vector<2x128xf32>
    %19 = vector.extract_strided_slice %18 {offsets = [0, 0], sizes = [1, 128], strides = [1, 1]} : vector<2x128xf32> to vector<1x128xf32>
    %20 = vector.broadcast %19 : vector<1x128xf32> to vector<128x128xf32>
    %21 = arith.mulf %14, %20 : vector<128x128xf32>
    %22 = arith.addf %4, %21 : vector<128x128xf32>
    %23 = vector.extract_strided_slice %18 {offsets = [1, 0], sizes = [1, 128], strides = [1, 1]} : vector<2x128xf32> to vector<1x128xf32>
    %24 = vector.broadcast %23 : vector<1x128xf32> to vector<128x128xf32>
    %25 = arith.mulf %17, %24 : vector<128x128xf32>
    %26 = arith.addf %22, %25 : vector<128x128xf32>
    %cst = arith.constant 0.000000e+00 : f32
    %27 = vector.broadcast %cst : f32 to vector<128x128xf32>
    %28 = arith.maximumf %26, %27 : vector<128x128xf32>
    %cst_13 = arith.constant dense<0.000000e+00> : vector<128x128xf32>
    %29 = tpu.matmul %0, %28, %cst_13 {dimension_numbers = #tpu.dot_dimension_numbers<[1], [0], [0], [1], [0, 0, 1, 1], [], []>} : vector<128x128xf32>, vector<128x128xf32>, vector<128x128xf32> -> vector<128x128xf32>
    %30 = arith.addf %29, %7 : vector<128x128xf32>
    %cst_14 = arith.constant 0.000000e+00 : f32
    %31 = vector.broadcast %cst_14 : f32 to vector<128x128xf32>
    %32 = arith.maximumf %30, %31 : vector<128x128xf32>
    %cst_15 = arith.constant dense<0.000000e+00> : vector<8x128xf32>
    %33 = tpu.matmul %1, %32, %cst_15 {dimension_numbers = #tpu.dot_dimension_numbers<[1], [0], [0], [1], [0, 0, 1, 1], [], []>} : vector<8x128xf32>, vector<128x128xf32>, vector<8x128xf32> -> vector<8x128xf32>
    %34 = arith.addf %33, %10 : vector<8x128xf32>
    %35 = vector.extract_strided_slice %34 {offsets = [0, 0], sizes = [2, 128], strides = [1, 1]} : vector<8x128xf32> to vector<2x128xf32>
    %c0_16 = arith.constant 0 : index
    %c0_17 = arith.constant 0 : index
    %36 = vector.load %arg8[%c0_16, %c0_17] : memref<2x128xf32, #tpu.memory_space<vmem>>, vector<2x128xf32>
    tpu.vector_store %arg8[%c0_16, %c0_17], %35 {strides = array<i32>} : memref<2x128xf32, #tpu.memory_space<vmem>>, vector<2x128xf32>,
    return
  }
  func.func @transform_0(%arg0: i32) -> (i32, i32) {
    %c0_i32 = arith.constant 0 : i32
    %c0_i32_0 = arith.constant 0 : i32
    return %c0_i32, %arg0 : i32, i32
  }
  func.func @transform_1(%arg0: i32) -> (i32, i32) {
    %c0_i32 = arith.constant 0 : i32
    %c0_i32_0 = arith.constant 0 : i32
    %c0_i32_1 = arith.constant 0 : i32
    return %c0_i32, %c0_i32_0 : i32, i32
  }
  func.func @transform_2(%arg0: i32) -> (i32, i32) {
    %c0_i32 = arith.constant 0 : i32
    %c0_i32_0 = arith.constant 0 : i32
    %c0_i32_1 = arith.constant 0 : i32
    return %c0_i32, %c0_i32_0 : i32, i32
  }
  func.func @transform_3(%arg0: i32) -> (i32, i32) {
    %c0_i32 = arith.constant 0 : i32
    %c0_i32_0 = arith.constant 0 : i32
    %c0_i32_1 = arith.constant 0 : i32
    return %c0_i32, %c0_i32_0 : i32, i32
  }
  func.func @transform_4(%arg0: i32) -> (i32, i32) {
    %c0_i32 = arith.constant 0 : i32
    %c0_i32_0 = arith.constant 0 : i32
    %c0_i32_1 = arith.constant 0 : i32
    return %c0_i32, %c0_i32_0 : i32, i32
  }
  func.func @transform_5(%arg0: i32) -> (i32, i32) {
    %c0_i32 = arith.constant 0 : i32
    %c0_i32_0 = arith.constant 0 : i32
    %c0_i32_1 = arith.constant 0 : i32
    return %c0_i32, %c0_i32_0 : i32, i32
  }
  func.func @transform_6(%arg0: i32) -> (i32, i32) {
    %c0_i32 = arith.constant 0 : i32
    %c0_i32_0 = arith.constant 0 : i32
    %c0_i32_1 = arith.constant 0 : i32
    return %c0_i32, %c0_i32_0 : i32, i32
  }
  func.func @transform_7(%arg0: i32) -> (i32, i32) {
    %c0_i32 = arith.constant 0 : i32
    %c0_i32_0 = arith.constant 0 : i32
    return %c0_i32, %arg0 : i32, i32
  }
}

</mosaic_0001>

<llo_original>
// kernel: tpu_custom_call.1
$region0: #{tpu_custom_call.1}
  #allocation0 [shape = 'u32[]', space=smem, size = 0x4, offset = 0x4, fixed_abs, tag = 'smem constant byte address 0x4 - core index']
  #allocation1 [shape = 'u32[144,128]{1,0:T(1,128)}', space=vmem, size = 0x12000, scoped, tag = 'internal scratch']
  %s0 = inlined_call_operand.vmem [shape: f32[2,128], index: 0, kind: input, shape index: {}]
  %s1 = inlined_call_operand.vmem [shape: f32[128,2], index: 1, kind: input, shape index: {}]
  %s2 = inlined_call_operand.vmem [shape: f32[128,1], index: 2, kind: input, shape index: {}]
  %s3 = inlined_call_operand.vmem [shape: f32[128,128], index: 3, kind: input, shape index: {}]
  %s4 = inlined_call_operand.vmem [shape: f32[128,1], index: 4, kind: input, shape index: {}]
  %s5 = inlined_call_operand.vmem [shape: f32[8,128], index: 5, kind: input, shape index: {}]
  %s6 = inlined_call_operand.vmem [shape: f32[8,1], index: 6, kind: input, shape index: {}]
  %s7 = inlined_call_operand.hbm [shape: f32[2,128], index: 7, kind: output, shape index: {}]
  %s8 = sld [smem:[#allocation0]]
  $region38: #{tpu_custom_call.1} parent=0
    _
  %s10 = ssub.s32 1, %s8
  %s11 = scalar_select 0, %s10, %s8
  $region1: #{tpu_custom_call.1} parent=0
    #allocation2 [shape = 'u8[1024]{0}', space=vmem, size = 0x400, scoped, tag = 'output window, operand 0, single buffered']
    #allocation3 [shape = 's32[1]{0}', space=sflag, size = 0x4, scoped, tag = 'scoped memory for tpu_custom_call.1']
    %12 = vsyncpa [#allocation3], 0
    // Predicated region
    $region2: #{tpu_custom_call.1} parent=1 // pred_check
      _
    $region3: #{tpu_custom_call.1} parent=1 // pred_check_branch
      %14 = sbr.rel (0) target = $region5
    $region4: #{tpu_custom_call.1} parent=1 // pred_region
      _
    $region5: #{tpu_custom_call.1} parent=1 // pred_fallthru
      _
    // Predicated region
    $region6: #{tpu_custom_call.1} parent=1 // pred_check
      _
    $region7: #{tpu_custom_call.1} parent=1 // pred_check_branch
      %16 = sbr.rel (0) target = $region9
    $region8: #{tpu_custom_call.1} parent=1 // pred_region
      _
    $region9: #{tpu_custom_call.1} parent=1 // pred_fallthru
      _
    // Predicated region
    $region10: #{tpu_custom_call.1} parent=1 // pred_check
      _
    $region11: #{tpu_custom_call.1} parent=1 // pred_check_branch
      %18 = sbr.rel (0) target = $region13
    $region12: #{tpu_custom_call.1} parent=1 // pred_region
      _
    $region13: #{tpu_custom_call.1} parent=1 // pred_fallthru
      _
    // Predicated region
    $region14: #{tpu_custom_call.1} parent=1 // pred_check
      _
    $region15: #{tpu_custom_call.1} parent=1 // pred_check_branch
      %20 = sbr.rel (0) target = $region17
    $region16: #{tpu_custom_call.1} parent=1 // pred_region
      _
    $region17: #{tpu_custom_call.1} parent=1 // pred_fallthru
      _
    // Predicated region
    $region18: #{tpu_custom_call.1} parent=1 // pred_check
      _
    $region19: #{tpu_custom_call.1} parent=1 // pred_check_branch
      %22 = sbr.rel (0) target = $region21
    $region20: #{tpu_custom_call.1} parent=1 // pred_region
      _
    $region21: #{tpu_custom_call.1} parent=1 // pred_fallthru
      _
    // Predicated region
    $region22: #{tpu_custom_call.1} parent=1 // pred_check
      _
    $region23: #{tpu_custom_call.1} parent=1 // pred_check_branch
      %24 = sbr.rel (0) target = $region25
    $region24: #{tpu_custom_call.1} parent=1 // pred_region
      _
    $region25: #{tpu_custom_call.1} parent=1 // pred_fallthru
      _
    // Predicated region
    $region26: #{tpu_custom_call.1} parent=1 // pred_check
      _
    $region27: #{tpu_custom_call.1} parent=1 // pred_check_branch
      %26 = sbr.rel (0) target = $region29
    $region28: #{tpu_custom_call.1} parent=1 // pred_region
      _
    $region29: #{tpu_custom_call.1} parent=1 // pred_fallthru
      _
    %v27 = vld [vmem:[%s3] sm:$0xff]
    %v28 = vld [vmem:[%s3 + $0x8] sm:$0xff]
    %v29 = vld [vmem:[%s3 + $0x10] sm:$0xff]
    %v30 = vld [vmem:[%s3 + $0x18] sm:$0xff]
    %v31 = vld [vmem:[%s3 + $0x20] sm:$0xff]
    %v32 = vld [vmem:[%s3 + $0x28] sm:$0xff]
    %v33 = vld [vmem:[%s3 + $0x30] sm:$0xff]
    %v34 = vld [vmem:[%s3 + $0x38] sm:$0xff]
    %v35 = vld [vmem:[%s3 + $0x40] sm:$0xff]
    %v36 = vld [vmem:[%s3 + $0x48] sm:$0xff]
    %v37 = vld [vmem:[%s3 + $0x50] sm:$0xff]
    %v38 = vld [vmem:[%s3 + $0x58] sm:$0xff]
    %v39 = vld [vmem:[%s3 + $0x60] sm:$0xff]
    %v40 = vld [vmem:[%s3 + $0x68] sm:$0xff]
    %v41 = vld [vmem:[%s3 + $0x70] sm:$0xff]
    %v42 = vld [vmem:[%s3 + $0x78] sm:$0xff]
    %v43 = vld [vmem:[%s5] sm:$0xff]
    %v44 = vld [vmem:[%s2] sm:$0xff]
    %v45 = vld [vmem:[%s2 + $0x8] sm:$0xff]
    %v46 = vld [vmem:[%s2 + $0x10] sm:$0xff]
    %v47 = vld [vmem:[%s2 + $0x18] sm:$0xff]
    %v48 = vld [vmem:[%s2 + $0x20] sm:$0xff]
    %v49 = vld [vmem:[%s2 + $0x28] sm:$0xff]
    %v50 = vld [vmem:[%s2 + $0x30] sm:$0xff]
    %v51 = vld [vmem:[%s2 + $0x38] sm:$0xff]
    %v52 = vld [vmem:[%s2 + $0x40] sm:$0xff]
    %v53 = vld [vmem:[%s2 + $0x48] sm:$0xff]
    %v54 = vld [vmem:[%s2 + $0x50] sm:$0xff]
    %v55 = vld [vmem:[%s2 + $0x58] sm:$0xff]
    %v56 = vld [vmem:[%s2 + $0x60] sm:$0xff]
    %v57 = vld [vmem:[%s2 + $0x68] sm:$0xff]
    %v58 = vld [vmem:[%s2 + $0x70] sm:$0xff]
    %v59 = vld [vmem:[%s2 + $0x78] sm:$0xff]
    %61 = vset.pattern.permute.xlu0 0
    %62 = vperm.xlu0 %61, %v44
    %v63 = vpop.permute.xlu0 %62
    %66 = vset.pattern.permute.xlu0 0
    %67 = vperm.xlu0 %66, %v45
    %v68 = vpop.permute.xlu0 %67
    %71 = vset.pattern.permute.xlu0 0
    %72 = vperm.xlu0 %71, %v46
    %v73 = vpop.permute.xlu0 %72
    %76 = vset.pattern.permute.xlu0 0
    %77 = vperm.xlu0 %76, %v47
    %v78 = vpop.permute.xlu0 %77
    %81 = vset.pattern.permute.xlu0 0
    %82 = vperm.xlu0 %81, %v48
    %v83 = vpop.permute.xlu0 %82
    %86 = vset.pattern.permute.xlu0 0
    %87 = vperm.xlu0 %86, %v49
    %v88 = vpop.permute.xlu0 %87
    %91 = vset.pattern.permute.xlu0 0
    %92 = vperm.xlu0 %91, %v50
    %v93 = vpop.permute.xlu0 %92
    %96 = vset.pattern.permute.xlu0 0
    %97 = vperm.xlu0 %96, %v51
    %v98 = vpop.permute.xlu0 %97
    %101 = vset.pattern.permute.xlu0 0
    %102 = vperm.xlu0 %101, %v52
    %v103 = vpop.permute.xlu0 %102
    %106 = vset.pattern.permute.xlu0 0
    %107 = vperm.xlu0 %106, %v53
    %v108 = vpop.permute.xlu0 %107
    %111 = vset.pattern.permute.xlu0 0
    %112 = vperm.xlu0 %111, %v54
    %v113 = vpop.permute.xlu0 %112
    %116 = vset.pattern.permute.xlu0 0
    %117 = vperm.xlu0 %116, %v55
    %v118 = vpop.permute.xlu0 %117
    %121 = vset.pattern.permute.xlu0 0
    %122 = vperm.xlu0 %121, %v56
    %v123 = vpop.permute.xlu0 %122
    %126 = vset.pattern.permute.xlu0 0
    %127 = vperm.xlu0 %126, %v57
    %v128 = vpop.permute.xlu0 %127
    %131 = vset.pattern.permute.xlu0 0
    %132 = vperm.xlu0 %131, %v58
    %v133 = vpop.permute.xlu0 %132
    %136 = vset.pattern.permute.xlu0 0
    %137 = vperm.xlu0 %136, %v59
    %v138 = vpop.permute.xlu0 %137
    %v140 = vld [vmem:[%s4] sm:$0xff]
    %v141 = vld [vmem:[%s4 + $0x8] sm:$0xff]
    %v142 = vld [vmem:[%s4 + $0x10] sm:$0xff]
    %v143 = vld [vmem:[%s4 + $0x18] sm:$0xff]
    %v144 = vld [vmem:[%s4 + $0x20] sm:$0xff]
    %v145 = vld [vmem:[%s4 + $0x28] sm:$0xff]
    %v146 = vld [vmem:[%s4 + $0x30] sm:$0xff]
    %v147 = vld [vmem:[%s4 + $0x38] sm:$0xff]
    %v148 = vld [vmem:[%s4 + $0x40] sm:$0xff]
    %v149 = vld [vmem:[%s4 + $0x48] sm:$0xff]
    %v150 = vld [vmem:[%s4 + $0x50] sm:$0xff]
    %v151 = vld [vmem:[%s4 + $0x58] sm:$0xff]
    %v152 = vld [vmem:[%s4 + $0x60] sm:$0xff]
    %v153 = vld [vmem:[%s4 + $0x68] sm:$0xff]
    %v154 = vld [vmem:[%s4 + $0x70] sm:$0xff]
    %v155 = vld [vmem:[%s4 + $0x78] sm:$0xff]
    %157 = vset.pattern.permute.xlu0 0
    %158 = vperm.xlu0 %157, %v140
    %v159 = vpop.permute.xlu0 %158
    %162 = vset.pattern.permute.xlu0 0
    %163 = vperm.xlu0 %162, %v141
    %v164 = vpop.permute.xlu0 %163
    %167 = vset.pattern.permute.xlu0 0
    %168 = vperm.xlu0 %167, %v142
    %v169 = vpop.permute.xlu0 %168
    %172 = vset.pattern.permute.xlu0 0
    %173 = vperm.xlu0 %172, %v143
    %v174 = vpop.permute.xlu0 %173
    %177 = vset.pattern.permute.xlu0 0
    %178 = vperm.xlu0 %177, %v144
    %v179 = vpop.permute.xlu0 %178
    %182 = vset.pattern.permute.xlu0 0
    %183 = vperm.xlu0 %182, %v145
    %v184 = vpop.permute.xlu0 %183
    %187 = vset.pattern.permute.xlu0 0
    %188 = vperm.xlu0 %187, %v146
    %v189 = vpop.permute.xlu0 %188
    %192 = vset.pattern.permute.xlu0 0
    %193 = vperm.xlu0 %192, %v147
    %v194 = vpop.permute.xlu0 %193
    %197 = vset.pattern.permute.xlu0 0
    %198 = vperm.xlu0 %197, %v148
    %v199 = vpop.permute.xlu0 %198
    %202 = vset.pattern.permute.xlu0 0
    %203 = vperm.xlu0 %202, %v149
    %v204 = vpop.permute.xlu0 %203
    %207 = vset.pattern.permute.xlu0 0
    %208 = vperm.xlu0 %207, %v150
    %v209 = vpop.permute.xlu0 %208
    %212 = vset.pattern.permute.xlu0 0
    %213 = vperm.xlu0 %212, %v151
    %v214 = vpop.permute.xlu0 %213
    %217 = vset.pattern.permute.xlu0 0
    %218 = vperm.xlu0 %217, %v152
    %v219 = vpop.permute.xlu0 %218
    %222 = vset.pattern.permute.xlu0 0
    %223 = vperm.xlu0 %222, %v153
    %v224 = vpop.permute.xlu0 %223
    %227 = vset.pattern.permute.xlu0 0
    %228 = vperm.xlu0 %227, %v154
    %v229 = vpop.permute.xlu0 %228
    %232 = vset.pattern.permute.xlu0 0
    %233 = vperm.xlu0 %232, %v155
    %v234 = vpop.permute.xlu0 %233
    %v236 = vld [vmem:[%s6] sm:$0xff]
    %238 = vset.pattern.permute.xlu0 0
    %239 = vperm.xlu0 %238, %v236
    %v240 = vpop.permute.xlu0 %239
    %v242 = vld [vmem:[%s1] sm:$0xff]
    %v243 = vld [vmem:[%s1 + $0x8] sm:$0xff]
    %v244 = vld [vmem:[%s1 + $0x10] sm:$0xff]
    %v245 = vld [vmem:[%s1 + $0x18] sm:$0xff]
    %v246 = vld [vmem:[%s1 + $0x20] sm:$0xff]
    %v247 = vld [vmem:[%s1 + $0x28] sm:$0xff]
    %v248 = vld [vmem:[%s1 + $0x30] sm:$0xff]
    %v249 = vld [vmem:[%s1 + $0x38] sm:$0xff]
    %v250 = vld [vmem:[%s1 + $0x40] sm:$0xff]
    %v251 = vld [vmem:[%s1 + $0x48] sm:$0xff]
    %v252 = vld [vmem:[%s1 + $0x50] sm:$0xff]
    %v253 = vld [vmem:[%s1 + $0x58] sm:$0xff]
    %v254 = vld [vmem:[%s1 + $0x60] sm:$0xff]
    %v255 = vld [vmem:[%s1 + $0x68] sm:$0xff]
    %v256 = vld [vmem:[%s1 + $0x70] sm:$0xff]
    %v257 = vld [vmem:[%s1 + $0x78] sm:$0xff]
    %259 = vset.pattern.permute.xlu0 0
    %260 = vperm.xlu0 %259, %v242
    %v261 = vpop.permute.xlu0 %260
    %264 = vset.pattern.permute.xlu0 0
    %265 = vperm.xlu0 %264, %v243
    %v266 = vpop.permute.xlu0 %265
    %269 = vset.pattern.permute.xlu0 0
    %270 = vperm.xlu0 %269, %v244
    %v271 = vpop.permute.xlu0 %270
    %274 = vset.pattern.permute.xlu0 0
    %275 = vperm.xlu0 %274, %v245
    %v276 = vpop.permute.xlu0 %275
    %279 = vset.pattern.permute.xlu0 0
    %280 = vperm.xlu0 %279, %v246
    %v281 = vpop.permute.xlu0 %280
    %284 = vset.pattern.permute.xlu0 0
    %285 = vperm.xlu0 %284, %v247
    %v286 = vpop.permute.xlu0 %285
    %289 = vset.pattern.permute.xlu0 0
    %290 = vperm.xlu0 %289, %v248
    %v291 = vpop.permute.xlu0 %290
    %294 = vset.pattern.permute.xlu0 0
    %295 = vperm.xlu0 %294, %v249
    %v296 = vpop.permute.xlu0 %295
    %299 = vset.pattern.permute.xlu0 0
    %300 = vperm.xlu0 %299, %v250
    %v301 = vpop.permute.xlu0 %300
    %304 = vset.pattern.permute.xlu0 0
    %305 = vperm.xlu0 %304, %v251
    %v306 = vpop.permute.xlu0 %305
    %309 = vset.pattern.permute.xlu0 0
    %310 = vperm.xlu0 %309, %v252
    %v311 = vpop.permute.xlu0 %310
    %314 = vset.pattern.permute.xlu0 0
    %315 = vperm.xlu0 %314, %v253
    %v316 = vpop.permute.xlu0 %315
    %319 = vset.pattern.permute.xlu0 0
    %320 = vperm.xlu0 %319, %v254
    %v321 = vpop.permute.xlu0 %320
    %324 = vset.pattern.permute.xlu0 0
    %325 = vperm.xlu0 %324, %v255
    %v326 = vpop.permute.xlu0 %325
    %329 = vset.pattern.permute.xlu0 0
    %330 = vperm.xlu0 %329, %v256
    %v331 = vpop.permute.xlu0 %330
    %334 = vset.pattern.permute.xlu0 0
    %335 = vperm.xlu0 %334, %v257
    %v336 = vpop.permute.xlu0 %335
    %338 = vset.pattern.permute.xlu0 1
    %339 = vperm.xlu0 %338, %v242
    %v340 = vpop.permute.xlu0 %339
    %342 = vset.pattern.permute.xlu0 1
    %343 = vperm.xlu0 %342, %v243
    %v344 = vpop.permute.xlu0 %343
    %346 = vset.pattern.permute.xlu0 1
    %347 = vperm.xlu0 %346, %v244
    %v348 = vpop.permute.xlu0 %347
    %350 = vset.pattern.permute.xlu0 1
    %351 = vperm.xlu0 %350, %v245
    %v352 = vpop.permute.xlu0 %351
    %354 = vset.pattern.permute.xlu0 1
    %355 = vperm.xlu0 %354, %v246
    %v356 = vpop.permute.xlu0 %355
    %358 = vset.pattern.permute.xlu0 1
    %359 = vperm.xlu0 %358, %v247
    %v360 = vpop.permute.xlu0 %359
    %362 = vset.pattern.permute.xlu0 1
    %363 = vperm.xlu0 %362, %v248
    %v364 = vpop.permute.xlu0 %363
    %366 = vset.pattern.permute.xlu0 1
    %367 = vperm.xlu0 %366, %v249
    %v368 = vpop.permute.xlu0 %367
    %370 = vset.pattern.permute.xlu0 1
    %371 = vperm.xlu0 %370, %v250
    %v372 = vpop.permute.xlu0 %371
    %374 = vset.pattern.permute.xlu0 1
    %375 = vperm.xlu0 %374, %v251
    %v376 = vpop.permute.xlu0 %375
    %378 = vset.pattern.permute.xlu0 1
    %379 = vperm.xlu0 %378, %v252
    %v380 = vpop.permute.xlu0 %379
    %382 = vset.pattern.permute.xlu0 1
    %383 = vperm.xlu0 %382, %v253
    %v384 = vpop.permute.xlu0 %383
    %386 = vset.pattern.permute.xlu0 1
    %387 = vperm.xlu0 %386, %v254
    %v388 = vpop.permute.xlu0 %387
    %390 = vset.pattern.permute.xlu0 1
    %391 = vperm.xlu0 %390, %v255
    %v392 = vpop.permute.xlu0 %391
    %394 = vset.pattern.permute.xlu0 1
    %395 = vperm.xlu0 %394, %v256
    %v396 = vpop.permute.xlu0 %395
    %398 = vset.pattern.permute.xlu0 1
    %399 = vperm.xlu0 %398, %v257
    %v400 = vpop.permute.xlu0 %399
    %v402 = vld [vmem:[%s0] sm:$0x3]
    %v403 = vlaneseq
    %v404 = vshrl.u32 %v403, 7
    %v405 = vsub.s32 0, %v404
    %v406 = vrot.slane %v402, %v405
    %v407 = vmul.f32 %v261, %v406
    %v408 = vmul.f32 %v266, %v406
    %v409 = vmul.f32 %v271, %v406
    %v410 = vmul.f32 %v276, %v406
    %v411 = vmul.f32 %v281, %v406
    %v412 = vmul.f32 %v286, %v406
    %v413 = vmul.f32 %v291, %v406
    %v414 = vmul.f32 %v296, %v406
    %v415 = vmul.f32 %v301, %v406
    %v416 = vmul.f32 %v306, %v406
    %v417 = vmul.f32 %v311, %v406
    %v418 = vmul.f32 %v316, %v406
    %v419 = vmul.f32 %v321, %v406
    %v420 = vmul.f32 %v326, %v406
    %v421 = vmul.f32 %v331, %v406
    %v422 = vmul.f32 %v336, %v406
    %v423 = vadd.f32 %v63, %v407
    %v424 = vadd.f32 %v68, %v408
    %v425 = vadd.f32 %v73, %v409
    %v426 = vadd.f32 %v78, %v410
    %v427 = vadd.f32 %v83, %v411
    %v428 = vadd.f32 %v88, %v412
    %v429 = vadd.f32 %v93, %v413
    %v430 = vadd.f32 %v98, %v414
    %v431 = vadd.f32 %v103, %v415
    %v432 = vadd.f32 %v108, %v416
    %v433 = vadd.f32 %v113, %v417
    %v434 = vadd.f32 %v118, %v418
    %v435 = vadd.f32 %v123, %v419
    %v436 = vadd.f32 %v128, %v420
    %v437 = vadd.f32 %v133, %v421
    %v438 = vadd.f32 %v138, %v422
    %v439 = vlaneseq
    %v440 = vshrl.u32 %v439, 7
    %v441 = vsub.s32 1, %v440
    %v442 = vrot.slane %v402, %v441
    %v443 = vmul.f32 %v340, %v442
    %v444 = vmul.f32 %v344, %v442
    %v445 = vmul.f32 %v348, %v442
    %v446 = vmul.f32 %v352, %v442
    %v447 = vmul.f32 %v356, %v442
    %v448 = vmul.f32 %v360, %v442
    %v449 = vmul.f32 %v364, %v442
    %v450 = vmul.f32 %v368, %v442
    %v451 = vmul.f32 %v372, %v442
    %v452 = vmul.f32 %v376, %v442
    %v453 = vmul.f32 %v380, %v442
    %v454 = vmul.f32 %v384, %v442
    %v455 = vmul.f32 %v388, %v442
    %v456 = vmul.f32 %v392, %v442
    %v457 = vmul.f32 %v396, %v442
    %v458 = vmul.f32 %v400, %v442
    %v459 = vadd.f32 %v423, %v443
    %v460 = vadd.f32 %v424, %v444
    %v461 = vadd.f32 %v425, %v445
    %v462 = vadd.f32 %v426, %v446
    %v463 = vadd.f32 %v427, %v447
    %v464 = vadd.f32 %v428, %v448
    %v465 = vadd.f32 %v429, %v449
    %v466 = vadd.f32 %v430, %v450
    %v467 = vadd.f32 %v431, %v451
    %v468 = vadd.f32 %v432, %v452
    %v469 = vadd.f32 %v433, %v453
    %v470 = vadd.f32 %v434, %v454
    %v471 = vadd.f32 %v435, %v455
    %v472 = vadd.f32 %v436, %v456
    %v473 = vadd.f32 %v437, %v457
    %v474 = vadd.f32 %v438, %v458
    %v475 = vmax.f32 %v459, 0.0
    %v476 = vmax.f32 %v460, 0.0
    %v477 = vmax.f32 %v461, 0.0
    %v478 = vmax.f32 %v462, 0.0
    %v479 = vmax.f32 %v463, 0.0
    %v480 = vmax.f32 %v464, 0.0
    %v481 = vmax.f32 %v465, 0.0
    %v482 = vmax.f32 %v466, 0.0
    %v483 = vmax.f32 %v467, 0.0
    %v484 = vmax.f32 %v468, 0.0
    %v485 = vmax.f32 %v469, 0.0
    %v486 = vmax.f32 %v470, 0.0
    %v487 = vmax.f32 %v471, 0.0
    %v488 = vmax.f32 %v472, 0.0
    %v489 = vmax.f32 %v473, 0.0
    %v490 = vmax.f32 %v474, 0.0
    %491 = vmatprep.subr.mxu0 0.0
    %492 = vmatpush1.msra.mxu0 %v490
    %493 = vmatprep.subr.mxu0 0.0
    %494 = vmatpush1.msra.mxu0 %v489
    %495 = vmatprep.subr.mxu0 0.0
    %496 = vmatpush1.msra.mxu0 %v488
    %497 = vmatprep.subr.mxu0 0.0
    %498 = vmatpush1.msra.mxu0 %v487
    %499 = vmatprep.subr.mxu0 0.0
    %500 = vmatpush1.msra.mxu0 %v486
    %501 = vmatprep.subr.mxu0 0.0
    %502 = vmatpush1.msra.mxu0 %v485
    %503 = vmatprep.subr.mxu0 0.0
    %504 = vmatpush1.msra.mxu0 %v484
    %505 = vmatprep.subr.mxu0 0.0
    %506 = vmatpush1.msra.mxu0 %v483
    %507 = vmatprep.subr.mxu0 0.0
    %508 = vmatpush1.msra.mxu0 %v482
    %509 = vmatprep.subr.mxu0 0.0
    %510 = vmatpush1.msra.mxu0 %v481
    %511 = vmatprep.subr.mxu0 0.0
    %512 = vmatpush1.msra.mxu0 %v480
    %513 = vmatprep.subr.mxu0 0.0
    %514 = vmatpush1.msra.mxu0 %v479
    %515 = vmatprep.subr.mxu0 0.0
    %516 = vmatpush1.msra.mxu0 %v478
    %517 = vmatprep.subr.mxu0 0.0
    %518 = vmatpush1.msra.mxu0 %v477
    %519 = vmatprep.subr.mxu0 0.0
    %520 = vmatpush1.msra.mxu0 %v476
    %521 = vmatprep.subr.mxu0 0.0
    %522 = vmatpush1.msra.mxu0 %v475
    %523 = vmatprep.subr.mxu0 0.0
    %524 = vmatpush2.msra.mxu0 0.0
    %525 = vmatprep.subr.mxu0 0.0
    %526 = vmatpush2.msra.mxu0 0.0
    %527 = vmatprep.subr.mxu0 0.0
    %528 = vmatpush2.msra.mxu0 0.0
    %529 = vmatprep.subr.mxu0 0.0
    %530 = vmatpush2.msra.mxu0 0.0
    %531 = vmatprep.subr.mxu0 0.0
    %532 = vmatpush2.msra.mxu0 0.0
    %533 = vmatprep.subr.mxu0 0.0
    %534 = vmatpush2.msra.mxu0 0.0
    %535 = vmatprep.subr.mxu0 0.0
    %536 = vmatpush2.msra.mxu0 0.0
    %537 = vmatprep.subr.mxu0 0.0
    %538 = vmatpush2.msra.mxu0 0.0
    %539 = vmatprep.subr.mxu0 0.0
    %540 = vmatpush2.msra.mxu0 0.0
    %541 = vmatprep.subr.mxu0 0.0
    %542 = vmatpush2.msra.mxu0 0.0
    %543 = vmatprep.subr.mxu0 0.0
    %544 = vmatpush2.msra.mxu0 0.0
    %545 = vmatprep.subr.mxu0 0.0
    %546 = vmatpush2.msra.mxu0 0.0
    %547 = vmatprep.subr.mxu0 0.0
    %548 = vmatpush2.msra.mxu0 0.0
    %549 = vmatprep.subr.mxu0 0.0
    %550 = vmatpush2.msra.mxu0 0.0
    %551 = vmatprep.subr.mxu0 0.0
    %552 = vmatpush2.msra.mxu0 0.0
    %553 = vmatprep.subr.mxu0 0.0
    %554 = vmatpush2.msra.mxu0 0.0
    %555 = vmatprep.mubr.f32.mxu0 0.0
    %556 = vmatmul.mubr.f32.gmra.mxu0 %v27
    %v557 = vpop.f32.mrf.mxu0
    %v558 = vadd.f32 %v159, %v557
    %v559 = vpop.f32.mrf.mxu0
    %560 = vmatprep.mubr.f32.mxu0 0.0
    %561 = vmatmul.mubr.f32.gmra.mxu0 %v28
    %v562 = vpop.f32.mrf.mxu0
    %v563 = vadd.f32 %v164, %v562
    %v564 = vpop.f32.mrf.mxu0
    %565 = vmatprep.mubr.f32.mxu0 0.0
    %566 = vmatmul.mubr.f32.gmra.mxu0 %v29
    %v567 = vpop.f32.mrf.mxu0
    %v568 = vadd.f32 %v169, %v567
    %v569 = vpop.f32.mrf.mxu0
    %570 = vmatprep.mubr.f32.mxu0 0.0
    %571 = vmatmul.mubr.f32.gmra.mxu0 %v30
    %v572 = vpop.f32.mrf.mxu0
    %v573 = vadd.f32 %v174, %v572
    %v574 = vpop.f32.mrf.mxu0
    %575 = vmatprep.mubr.f32.mxu0 0.0
    %576 = vmatmul.mubr.f32.gmra.mxu0 %v31
    %v577 = vpop.f32.mrf.mxu0
    %v578 = vadd.f32 %v179, %v577
    %v579 = vpop.f32.mrf.mxu0
    %580 = vmatprep.mubr.f32.mxu0 0.0
    %581 = vmatmul.mubr.f32.gmra.mxu0 %v32
    %v582 = vpop.f32.mrf.mxu0
    %v583 = vadd.f32 %v184, %v582
    %v584 = vpop.f32.mrf.mxu0
    %585 = vmatprep.mubr.f32.mxu0 0.0
    %586 = vmatmul.mubr.f32.gmra.mxu0 %v33
    %v587 = vpop.f32.mrf.mxu0
    %v588 = vadd.f32 %v189, %v587
    %v589 = vpop.f32.mrf.mxu0
    %590 = vmatprep.mubr.f32.mxu0 0.0
    %591 = vmatmul.mubr.f32.gmra.mxu0 %v34
    %v592 = vpop.f32.mrf.mxu0
    %v593 = vadd.f32 %v194, %v592
    %v594 = vpop.f32.mrf.mxu0
    %595 = vmatprep.mubr.f32.mxu0 0.0
    %596 = vmatmul.mubr.f32.gmra.mxu0 %v35
    %v597 = vpop.f32.mrf.mxu0
    %v598 = vadd.f32 %v199, %v597
    %v599 = vpop.f32.mrf.mxu0
    %600 = vmatprep.mubr.f32.mxu0 0.0
    %601 = vmatmul.mubr.f32.gmra.mxu0 %v36
    %v602 = vpop.f32.mrf.mxu0
    %v603 = vadd.f32 %v204, %v602
    %v604 = vpop.f32.mrf.mxu0
    %605 = vmatprep.mubr.f32.mxu0 0.0
    %606 = vmatmul.mubr.f32.gmra.mxu0 %v37
    %v607 = vpop.f32.mrf.mxu0
    %v608 = vadd.f32 %v209, %v607
    %v609 = vpop.f32.mrf.mxu0
    %610 = vmatprep.mubr.f32.mxu0 0.0
    %611 = vmatmul.mubr.f32.gmra.mxu0 %v38
    %v612 = vpop.f32.mrf.mxu0
    %v613 = vadd.f32 %v214, %v612
    %v614 = vpop.f32.mrf.mxu0
    %615 = vmatprep.mubr.f32.mxu0 0.0
    %616 = vmatmul.mubr.f32.gmra.mxu0 %v39
    %v617 = vpop.f32.mrf.mxu0
    %v618 = vadd.f32 %v219, %v617
    %v619 = vpop.f32.mrf.mxu0
    %620 = vmatprep.mubr.f32.mxu0 0.0
    %621 = vmatmul.mubr.f32.gmra.mxu0 %v40
    %v622 = vpop.f32.mrf.mxu0
    %v623 = vadd.f32 %v224, %v622
    %v624 = vpop.f32.mrf.mxu0
    %625 = vmatprep.mubr.f32.mxu0 0.0
    %626 = vmatmul.mubr.f32.gmra.mxu0 %v41
    %v627 = vpop.f32.mrf.mxu0
    %v628 = vadd.f32 %v229, %v627
    %v629 = vpop.f32.mrf.mxu0
    %630 = vmatprep.mubr.f32.mxu0 0.0
    %631 = vmatmul.mubr.f32.gmra.mxu0 %v42
    %v632 = vpop.f32.mrf.mxu0
    %v633 = vadd.f32 %v234, %v632
    %v634 = vpop.f32.mrf.mxu0
    %635 = vdwg.mxu0
    %v636 = vmax.f32 %v558, 0.0
    %v637 = vmax.f32 %v563, 0.0
    %v638 = vmax.f32 %v568, 0.0
    %v639 = vmax.f32 %v573, 0.0
    %v640 = vmax.f32 %v578, 0.0
    %v641 = vmax.f32 %v583, 0.0
    %v642 = vmax.f32 %v588, 0.0
    %v643 = vmax.f32 %v593, 0.0
    %v644 = vmax.f32 %v598, 0.0
    %v645 = vmax.f32 %v603, 0.0
    %v646 = vmax.f32 %v608, 0.0
    %v647 = vmax.f32 %v613, 0.0
    %v648 = vmax.f32 %v618, 0.0
    %v649 = vmax.f32 %v623, 0.0
    %v650 = vmax.f32 %v628, 0.0
    %v651 = vmax.f32 %v633, 0.0
    %652 = vmatprep.subr.mxu0 0.0
    %653 = vmatpush1.msra.mxu0 %v651
    %654 = vmatprep.subr.mxu0 0.0
    %655 = vmatpush1.msra.mxu0 %v650
    %656 = vmatprep.subr.mxu0 0.0
    %657 = vmatpush1.msra.mxu0 %v649
    %658 = vmatprep.subr.mxu0 0.0
    %659 = vmatpush1.msra.mxu0 %v648
    %660 = vmatprep.subr.mxu0 0.0
    %661 = vmatpush1.msra.mxu0 %v647
    %662 = vmatprep.subr.mxu0 0.0
    %663 = vmatpush1.msra.mxu0 %v646
    %664 = vmatprep.subr.mxu0 0.0
    %665 = vmatpush1.msra.mxu0 %v645
    %666 = vmatprep.subr.mxu0 0.0
    %667 = vmatpush1.msra.mxu0 %v644
    %668 = vmatprep.subr.mxu0 0.0
    %669 = vmatpush1.msra.mxu0 %v643
    %670 = vmatprep.subr.mxu0 0.0
    %671 = vmatpush1.msra.mxu0 %v642
    %672 = vmatprep.subr.mxu0 0.0
    %673 = vmatpush1.msra.mxu0 %v641
    %674 = vmatprep.subr.mxu0 0.0
    %675 = vmatpush1.msra.mxu0 %v640
    %676 = vmatprep.subr.mxu0 0.0
    %677 = vmatpush1.msra.mxu0 %v639
    %678 = vmatprep.subr.mxu0 0.0
    %679 = vmatpush1.msra.mxu0 %v638
    %680 = vmatprep.subr.mxu0 0.0
    %681 = vmatpush1.msra.mxu0 %v637
    %682 = vmatprep.subr.mxu0 0.0
    %683 = vmatpush1.msra.mxu0 %v636
    %684 = vmatprep.subr.mxu0 0.0
    %685 = vmatpush2.msra.mxu0 0.0
    %686 = vmatprep.subr.mxu0 0.0
    %687 = vmatpush2.msra.mxu0 0.0
    %688 = vmatprep.subr.mxu0 0.0
    %689 = vmatpush2.msra.mxu0 0.0
    %690 = vmatprep.subr.mxu0 0.0
    %691 = vmatpush2.msra.mxu0 0.0
    %692 = vmatprep.subr.mxu0 0.0
    %693 = vmatpush2.msra.mxu0 0.0
    %694 = vmatprep.subr.mxu0 0.0
    %695 = vmatpush2.msra.mxu0 0.0
    %696 = vmatprep.subr.mxu0 0.0
    %697 = vmatpush2.msra.mxu0 0.0
    %698 = vmatprep.subr.mxu0 0.0
    %699 = vmatpush2.msra.mxu0 0.0
    %700 = vmatprep.subr.mxu0 0.0
    %701 = vmatpush2.msra.mxu0 0.0
    %702 = vmatprep.subr.mxu0 0.0
    %703 = vmatpush2.msra.mxu0 0.0
    %704 = vmatprep.subr.mxu0 0.0
    %705 = vmatpush2.msra.mxu0 0.0
    %706 = vmatprep.subr.mxu0 0.0
    %707 = vmatpush2.msra.mxu0 0.0
    %708 = vmatprep.subr.mxu0 0.0
    %709 = vmatpush2.msra.mxu0 0.0
    %710 = vmatprep.subr.mxu0 0.0
    %711 = vmatpush2.msra.mxu0 0.0
    %712 = vmatprep.subr.mxu0 0.0
    %713 = vmatpush2.msra.mxu0 0.0
    %714 = vmatprep.subr.mxu0 0.0
    %715 = vmatpush2.msra.mxu0 0.0
    %716 = vmatprep.mubr.f32.mxu0 0.0
    %717 = vmatmul.mubr.f32.gmra.mxu0 %v43
    %v718 = vpop.f32.mrf.mxu0
    %v719 = vadd.f32 %v240, %v718
    %v720 = vpop.f32.mrf.mxu0
    %721 = vdwg.mxu0
    %722 = vst [vmem:[#allocation2] sm:$0x3] %v719
    // Predicated region
    $region30: #{tpu_custom_call.1} parent=1 // pred_check
      _
    $region31: #{tpu_custom_call.1} parent=1 // pred_check_branch
      %724 = sbr.rel (0) target = $region33
    $region32: #{tpu_custom_call.1} parent=1 // pred_region
      %s726 = ssub.s32 32, 32
      %727 = vsyncadd [#allocation3], %s726
      %s729 = sshll.u32 [#allocation2], 4
      %s730 = int_to_ptr.vmem [resolvable:$true] %s729
      %732 = dma.vmem_to_hbm [thread:$0]  %s730, 32, %s7, [#allocation3]
    $region33: #{tpu_custom_call.1} parent=1 // pred_fallthru
      _
    // Predicated region
    $region34: #{tpu_custom_call.1} parent=1 // pred_check
      _
    $region35: #{tpu_custom_call.1} parent=1 // pred_check_branch
      %734 = sbr.rel (0) target = $region37
    $region36: #{tpu_custom_call.1} parent=1 // pred_region
      %735 = dma.done [#allocation3], 32
    $region37: #{tpu_custom_call.1} parent=1 // pred_fallthru
      _
    %736 = vsyncpa [#allocation3], 1

</llo_original>
